<compile_context>
chip_gen: v5e
topology: v5e:2x2
jax: 0.10.0
libtpu: 0.0.40
codegen_flags: <defaults>
</compile_context>

<pallas_src>
import functools
import math

import jax
import jax.numpy as jnp
from jax.experimental import pallas as pl
from jax.experimental.pallas import tpu as pltpu

EPS = 1e-5  # PyTorch InstanceNorm3d default (affine=False, biased variance)


def _round_up(x, m):
    return ((x + m - 1) // m) * m


# --------------------------------------------------------------------------
# Direct 3x3x3 convolution + fused InstanceNorm statistics.
# --------------------------------------------------------------------------

@functools.lru_cache(maxsize=None)
def _make_conv_kernel(taps, sub, n_sub, ct, inv_count):
    """taps: static row offsets of the 27 shifted input windows."""
    n_tap = len(taps)

    def kernel(x_ref, w_ref, b_ref, m_ref, o_ref, mean_ref, rstd_ref):
        # x_ref   : (1, Mx, Ca)      bf16  full padded, flattened input volume
        # w_ref   : (n_tap, Ca, ct)  bf16  resident weights for this Cout tile
        # b_ref   : (1, ct)          f32   bias
        # m_ref   : (Mp, 1)          f32   1.0 at valid (strided) output rows
        # o_ref   : (1, Mp, ct)      bf16  raw (flattened, padded) conv output
        # mean_ref, rstd_ref : (1, 1, ct) f32  fused InstanceNorm statistics
        bias = b_ref[...]                                   # (1, ct)
        s_acc = jnp.zeros((1, ct), jnp.float32)
        ss_acc = jnp.zeros((1, ct), jnp.float32)
        for sb in range(n_sub):                             # static row sub-tiles
            r0 = sb * sub
            acc = jnp.dot(x_ref[0, taps[0] + r0:taps[0] + r0 + sub, :],
                          w_ref[0], preferred_element_type=jnp.float32)
            for t in range(1, n_tap):                       # static 27-tap unroll
                acc += jnp.dot(x_ref[0, taps[t] + r0:taps[t] + r0 + sub, :],
                               w_ref[t], preferred_element_type=jnp.float32)
            acc = acc + bias
            o_ref[0, r0:r0 + sub, :] = acc.astype(o_ref.dtype)
            mv = m_ref[r0:r0 + sub, :]                      # (sub, 1)
            am = acc * mv
            s_acc = s_acc + jnp.sum(am, axis=0, keepdims=True)
            ss_acc = ss_acc + jnp.sum(acc * am, axis=0, keepdims=True)
        mean = s_acc * inv_count
        var = ss_acc * inv_count - mean * mean
        mean_ref[0] = mean
        rstd_ref[0] = jax.lax.rsqrt(jnp.maximum(var, 0.0) + EPS)

    return kernel


def conv3d_fused(x, w, b, stride):
    """3x3x3 conv (depth stride 1, pad 1) + fused InstanceNorm statistics.

    x: (N, D, H, W, Ca) NDHWC, w: (Cout, Cin, 3, 3, 3), b: (Cout,).
    Returns (y (N, Do, Ho, Wo, Coutp) bf16, mean (N, 1, Coutp) f32,
             rstd (N, 1, Coutp) f32) where mean/rstd are the statistics of the
    strided conv output over its valid positions (what InstanceNorm3d needs).
    """
    N, D, H, W, Ca = x.shape
    Cout, Cin, kd, kh, kw = w.shape
    sd, sh, sw = stride
    assert (kd, kh, kw) == (3, 3, 3) and sd == 1
    assert Ca >= Cin
    pd = ph = pw = 1
    Dp, Hp, Wp = D + 2 * pd, H + 2 * ph, W + 2 * pw
    Do = Dp - kd + 1
    Hf, Wf = Hp - kh + 1, Wp - kw + 1                 # full stride-1 output extent
    Ho, Wo = (Hp - kh) // sh + 1, (Wp - kw) // sw + 1
    Coutp = _round_up(Cout, 128)
    ct = 128                                          # Cout tile (VMEM + megacore)
    ncout = Coutp // ct

    Rp = _round_up(Hp * Wp + (kw - 1), 8)             # rows per padded depth plane
    m_need = Do * Rp                                  # all output planes as one M
    sub = 256 if m_need > 1024 else 128               # vreg-friendly accumulator
    Mp = _round_up(m_need, sub)
    halo = (kd - 1) * Rp + (kh - 1) * Wp + (kw - 1)
    Mx = _round_up(halo + Mp, 8)
    n_sub = Mp // sub

    # Input: pad spatially, flatten every padded depth plane to Rp rows.
    xb = jnp.pad(x.astype(jnp.bfloat16),
                 ((0, 0), (pd, pd), (ph, ph), (pw, pw), (0, 0)))
    xf = xb.reshape(N, Dp, Hp * Wp, Ca)
    xf = jnp.pad(xf, ((0, 0), (0, 0), (0, Rp - Hp * Wp), (0, 0)))
    xf = xf.reshape(N, Dp * Rp, Ca)
    xf = jnp.pad(xf, ((0, 0), (0, Mx - Dp * Rp), (0, 0)))

    # Weights: (27, Ca, Coutp), zero-padded input/output channels.
    wt = jnp.transpose(w.astype(jnp.bfloat16), (2, 3, 4, 1, 0))
    wt = wt.reshape(kd * kh * kw, Cin, Cout)
    wt = jnp.pad(wt, ((0, 0), (0, Ca - Cin), (0, Coutp - Cout)))
    bt = jnp.pad(b.astype(jnp.float32), (0, Coutp - Cout)).reshape(1, Coutp)

    # Row validity (+stride) mask for the fused statistics.
    r = jnp.arange(Mp, dtype=jnp.int32)
    q = r % Rp
    hh = q // Wp
    ww = q % Wp
    valid = ((r < Do * Rp) & (hh < Hf) & (hh % sh == 0)
             & (ww < Wf) & (ww % sw == 0))
    msk = valid.astype(jnp.float32).reshape(Mp, 1)

    taps = tuple(dd * Rp + rr * Wp + cc
                 for dd in range(kd) for rr in range(kh) for cc in range(kw))
    kernel = _make_conv_kernel(taps, sub, n_sub, ct, 1.0 / (Do * Ho * Wo))

    flops = 2 * N * Mp * kd * kh * kw * Ca * Coutp
    bytes_accessed = (N * Mx * Ca * 2
                      + N * kd * kh * kw * Ca * Coutp * 2
                      + N * Mp * Coutp * 2)

    out, mean, rstd = pl.pallas_call(
        kernel,
        out_shape=(jax.ShapeDtypeStruct((N, Mp, Coutp), jnp.bfloat16),
                   jax.ShapeDtypeStruct((N, 1, Coutp), jnp.float32),
                   jax.ShapeDtypeStruct((N, 1, Coutp), jnp.float32)),
        grid_spec=pltpu.PrefetchScalarGridSpec(
            num_scalar_prefetch=0,
            grid=(N, ncout),
            in_specs=[
                pl.BlockSpec((1, Mx, Ca), lambda n, j: (n, 0, 0)),
                pl.BlockSpec((kd * kh * kw, Ca, ct), lambda n, j: (0, 0, j)),
                pl.BlockSpec((1, ct), lambda n, j: (0, j)),
                pl.BlockSpec((Mp, 1), lambda n, j: (0, 0)),
            ],
            out_specs=[
                pl.BlockSpec((1, Mp, ct), lambda n, j: (n, 0, j)),
                pl.BlockSpec((1, 1, ct), lambda n, j: (n, 0, j)),
                pl.BlockSpec((1, 1, ct), lambda n, j: (n, 0, j)),
            ],
        ),
        compiler_params=pltpu.CompilerParams(
            dimension_semantics=("parallel", "parallel")),
        cost_estimate=pl.CostEstimate(flops=int(flops), transcendentals=0,
                                      bytes_accessed=int(bytes_accessed)),
    )(xf, wt, bt, msk)

    # raw -> compact: drop per-plane padding and wrapped columns, apply H/W stride.
    y = out[:, :Do * Rp, :].reshape(N, Do, Rp, Coutp)[:, :, :Hf * Wp, :]
    y = y.reshape(N, Do, Hf, Wp, Coutp)[:, :, ::sh, ::sw, :][:, :, :Ho, :Wo, :]
    return y, mean, rstd


# --------------------------------------------------------------------------
# Tiled GEMM + bias (bf16 MXU, f32 acc) -- stem im2col GEMM and 1x1 shortcuts.
# --------------------------------------------------------------------------

def _matmul_bias_kernel(a_ref, b_ref, bias_ref, o_ref, acc_ref):
    @pl.when(pl.program_id(1) == 0)
    def _():
        acc_ref[...] = jnp.zeros_like(acc_ref)

    acc_ref[...] += jnp.dot(a_ref[...], b_ref[...],
                            preferred_element_type=jnp.float32)

    @pl.when(pl.program_id(1) == pl.num_programs(1) - 1)
    def _():
        o_ref[...] = (acc_ref[...] + bias_ref[...]).astype(o_ref.dtype)


def matmul_bias(a, b, bias, out_dtype=jnp.bfloat16):
    """a: (M, K), b: (K, Nc), bias: (Nc,) -> (M, Nc)."""
    M, K = a.shape
    Nc = b.shape[1]
    Np = _round_up(Nc, 128)
    tk = min(512, _round_up(K, 128))
    Kp = _round_up(K, tk)
    tm = min(256, _round_up(M, 16))
    Mp = _round_up(M, tm)

    a_p = jnp.pad(a.astype(jnp.bfloat16), ((0, Mp - M), (0, Kp - K)))
    b_p = jnp.pad(b.astype(jnp.bfloat16), ((0, Kp - K), (0, Np - Nc)))
    bias_p = jnp.pad(bias.astype(jnp.float32), (0, Np - Nc)).reshape(1, Np)

    out = pl.pallas_call(
        _matmul_bias_kernel,
        out_shape=jax.ShapeDtypeStruct((Mp, Np), out_dtype),
        grid_spec=pltpu.PrefetchScalarGridSpec(
            num_scalar_prefetch=0,
            grid=(Mp // tm, Kp // tk),
            in_specs=[
                pl.BlockSpec((tm, tk), lambda i, k: (i, k)),
                pl.BlockSpec((tk, Np), lambda i, k: (k, 0)),
                pl.BlockSpec((1, Np), lambda i, k: (0, 0)),
            ],
            out_specs=pl.BlockSpec((tm, Np), lambda i, k: (i, 0)),
            scratch_shapes=[pltpu.VMEM((tm, Np), jnp.float32)],
        ),
        compiler_params=pltpu.CompilerParams(
            dimension_semantics=("parallel", "arbitrary")),
        cost_estimate=pl.CostEstimate(
            flops=int(2 * Mp * Kp * Np), transcendentals=0,
            bytes_accessed=int(2 * (Mp * Kp + Kp * Np + Mp * Np))),
    )(a_p, b_p, bias_p)
    return out[:M, :Nc]


def conv3d_stem(x, w, b):
    """Stem 3x3x3 conv (stride 1, pad 1, tiny Cin): XLA im2col + one bf16 GEMM."""
    N, D, H, W, Cin = x.shape
    Cout = w.shape[0]
    Coutp = _round_up(Cout, 128)
    xp = jnp.pad(x.astype(jnp.bfloat16),
                 ((0, 0), (1, 1), (1, 1), (1, 1), (0, 0)))
    cols = [xp[:, dd:dd + D, hh:hh + H, ww:ww + W, :]
            for dd in range(3) for hh in range(3) for ww in range(3)]
    xi = jnp.concatenate(cols, axis=-1)                   # (N, D, H, W, 27*Cin)
    K = 27 * Cin
    wm = jnp.transpose(w.astype(jnp.bfloat16), (2, 3, 4, 1, 0)).reshape(K, Cout)
    wm = jnp.pad(wm, ((0, 0), (0, Coutp - Cout)))
    bp = jnp.pad(b.astype(jnp.float32), (0, Coutp - Cout))
    y = matmul_bias(xi.reshape(N * D * H * W, K), wm, bp)
    return y.reshape(N, D, H, W, Coutp)


def conv1x1(x, w, b, stride):
    """Pointwise conv with spatial stride: exact input subsample + GEMM + bias."""
    sd, sh, sw = stride
    xs = x[:, ::sd, ::sh, ::sw, :]
    N, Do, Ho, Wo, Ca = xs.shape
    Cout, Cin = w.shape[0], w.shape[1]
    Coutp = _round_up(Cout, 128)
    wm = jnp.transpose(w.reshape(Cout, Cin)).astype(jnp.bfloat16)   # (Cin, Cout)
    wm = jnp.pad(wm, ((0, Ca - Cin), (0, Coutp - Cout)))
    bp = jnp.pad(b.astype(jnp.float32), (0, Coutp - Cout))
    y = matmul_bias(xs.reshape(N * Do * Ho * Wo, Ca), wm, bp)
    return y.reshape(N, Do, Ho, Wo, Coutp)


# --------------------------------------------------------------------------
# Fused InstanceNorm apply (+ optional residual) + ReLU  (single Pallas pass)
# --------------------------------------------------------------------------

def _apply_relu_kernel(x_ref, mean_ref, rstd_ref, o_ref):
    xv = x_ref[0].astype(jnp.float32)
    y = (xv - mean_ref[0]) * rstd_ref[0]
    o_ref[0] = jnp.maximum(y, 0.0).astype(o_ref.dtype)


def _apply_add_relu_kernel(x_ref, r_ref, mean_ref, rstd_ref, o_ref):
    xv = x_ref[0].astype(jnp.float32)
    y = (xv - mean_ref[0]) * rstd_ref[0] + r_ref[0].astype(jnp.float32)
    o_ref[0] = jnp.maximum(y, 0.0).astype(o_ref.dtype)


def norm_apply(x, mean, rstd, residual=None):
    """x: (N, D, H, W, C); mean/rstd: (N, 1, C) f32.  Returns bf16, same shape."""
    N, D, H, W, C = x.shape
    S = D * H * W
    St = min(512, _round_up(S, 8))
    Sp = _round_up(S, St)
    Ct = 128 if C % 128 == 0 else C
    nS, nC = Sp // St, C // Ct

    x2 = x.reshape(N, S, C).astype(jnp.bfloat16)
    if Sp != S:
        x2 = jnp.pad(x2, ((0, 0), (0, Sp - S), (0, 0)))

    x_spec = pl.BlockSpec((1, St, Ct), lambda n, c, s: (n, s, c))
    stat_spec = pl.BlockSpec((1, 1, Ct), lambda n, c, s: (n, 0, c))

    if residual is None:
        kernel = _apply_relu_kernel
        in_specs = [x_spec, stat_spec, stat_spec]
        args = (x2, mean, rstd)
    else:
        r2 = residual.reshape(N, S, C).astype(jnp.bfloat16)
        if Sp != S:
            r2 = jnp.pad(r2, ((0, 0), (0, Sp - S), (0, 0)))
        kernel = _apply_add_relu_kernel
        in_specs = [x_spec, x_spec, stat_spec, stat_spec]
        args = (x2, r2, mean, rstd)

    out = pl.pallas_call(
        kernel,
        out_shape=jax.ShapeDtypeStruct((N, Sp, C), jnp.bfloat16),
        grid_spec=pltpu.PrefetchScalarGridSpec(
            num_scalar_prefetch=0,
            grid=(N, nC, nS),
            in_specs=in_specs,
            out_specs=x_spec,
        ),
        compiler_params=pltpu.CompilerParams(
            dimension_semantics=("parallel", "parallel", "parallel")),
    )(*args)
    return out[:, :S, :].reshape(N, D, H, W, C)


def _instance_stats(y):
    """Plain-JAX InstanceNorm statistics (used only for the tiny stem output)."""
    N, D, H, W, C = y.shape
    yf = y.reshape(N, D * H * W, C).astype(jnp.float32)
    mean = jnp.mean(yf, axis=1, keepdims=True)
    var = jnp.mean(yf * yf, axis=1, keepdims=True) - mean * mean
    rstd = jax.lax.rsqrt(jnp.maximum(var, 0.0) + EPS)
    return mean, rstd


# ----------------------------- parameters -----------------------------------

def init_conv(key, cout, cin, kd, kh, kw):
    kw_, kb = jax.random.split(key)
    fan_in = cin * kd * kh * kw
    bound = 1.0 / math.sqrt(fan_in)
    w = jax.random.uniform(kw_, (cout, cin, kd, kh, kw), jnp.float32, -bound, bound)
    b = jax.random.uniform(kb, (cout,), jnp.float32, -bound, bound)
    return w, b


def make_residual_params(key, cin, cout, use_1x1conv, stride):
    k1, k2, k3 = jax.random.split(key, 3)
    p = {
        "conv1": init_conv(k1, cout, cin, 3, 3, 3),
        "conv2": init_conv(k2, cout, cout, 3, 3, 3),
        "stride": stride,
        "use_1x1": use_1x1conv,
    }
    if use_1x1conv:
        p["conv3"] = init_conv(k3, cout, cin, 1, 1, 1)
    return p


def init_resnet3d_params(key, image_channel,
                         layers=(2, 2, 2, 2),
                         layer_out_channels=(64, 128, 256, 512)):
    keys = iter(jax.random.split(key, 32))
    params = {"conv1": init_conv(next(keys), layer_out_channels[0],
                                 image_channel, 3, 3, 3),
              "out_channels": layer_out_channels[-1]}
    in_c = layer_out_channels[0]
    for li, (oc, nb) in enumerate(zip(layer_out_channels, layers)):
        blocks = []
        if li == 0:  # first_block=True: no downsample, no 1x1 conv
            blocks.append(make_residual_params(next(keys), in_c, oc, False, 1))
        else:
            blocks.append(make_residual_params(next(keys), in_c, oc, True, 2))
        in_c = oc
        for _ in range(1, nb):
            blocks.append(make_residual_params(next(keys), oc, oc, False, 1))
        params[f"layer{li + 1}"] = blocks
    return params


# ----------------------------- forward ---------------------------------------

def residual_forward(p, x):
    s = p["stride"]
    y1, m1, r1 = conv3d_fused(x, *p["conv1"], stride=(1, s, s))
    y1 = norm_apply(y1, m1, r1)
    y2, m2, r2 = conv3d_fused(y1, *p["conv2"], stride=(1, 1, 1))
    if p["use_1x1"]:
        identity = conv1x1(x, *p["conv3"], stride=(1, s, s))
    else:
        identity = x
    return norm_apply(y2, m2, r2, residual=identity)


def resnet3d_forward(params, x_ncdhw):
    # PyTorch NCDHW -> NDHWC
    x = jnp.transpose(x_ncdhw, (0, 2, 3, 4, 1))
    y = conv3d_stem(x, *params["conv1"])
    m, r = _instance_stats(y)
    y = norm_apply(y, m, r)
    for name in ("layer1", "layer2", "layer3", "layer4"):
        for bp in params[name]:
            y = residual_forward(bp, y)
    # Drop channel padding (512 is already a multiple of 128 -> no-op) and return
    # NCDHW float32 to match the PyTorch output convention.
    y = y[..., :params["out_channels"]]
    return jnp.transpose(y, (0, 4, 1, 2, 3)).astype(jnp.float32)


# ----------------------------- main -------------------------------------------

if __name__ == "__main__":
    key = jax.random.PRNGKey(0)
    pkey, xkey = jax.random.split(key)

    N, C_in, D, H, W = 2, 2, 4, 16, 16
    params = init_resnet3d_params(pkey, C_in)
    x = jax.random.normal(xkey, (N, C_in, D, H, W), jnp.float32)

    out = resnet3d_forward(params, x)
    out = jax.block_until_ready(out)

    # three stride-2 stages: 16 -> 8 -> 4 -> 2 in H/W, depth preserved
    assert out.shape == (N, 512, D, 2, 2), out.shape
    assert bool(jnp.all(jnp.isfinite(out)))
    print("KERNEL_OK")
</pallas_src>

<mosaic_0001>
module attributes {stable_mosaic.version = 11 : i64} {
  func.func @_matmul_bias_kernel(%arg0: i32, %arg1: i32, %arg2: memref<256x128xbf16, #tpu.memory_space<vmem>>, %arg3: memref<128x128xbf16, #tpu.memory_space<vmem>>, %arg4: memref<1x128xf32, #tpu.memory_space<vmem>>, %arg5: memref<256x128xbf16, #tpu.memory_space<vmem>>, %arg6: memref<256x128xf32, #tpu.memory_space<vmem>>) attributes {dimension_semantics = [#tpu.dimension_semantics<parallel>, #tpu.dimension_semantics<arbitrary>], iteration_bounds = array<i64: 8, 1>, scalar_prefetch = 0 : i64, scratch_operands = 1 : i64, tpu.core_type = #tpu.core_type<tc>, window_params = [{transform_indices = @transform_0, window_bounds = array<i64: 256, 128>}, {transform_indices = @transform_1, window_bounds = array<i64: 128, 128>}, {pipeline_mode = #tpu.pipeline_mode<synchronous>, transform_indices = @transform_2, window_bounds = array<i64: 1, 128>}, {transform_indices = @transform_3, window_bounds = array<i64: 256, 128>}]} {
    %c0_i32 = arith.constant 0 : i32
    %0 = arith.cmpi eq, %arg1, %c0_i32 : i32
    %1 = arith.extui %0 : i1 to i32
    %c0_i32_0 = arith.constant 0 : i32
    %2 = arith.cmpi ne, %1, %c0_i32_0 : i32
    scf.if %2 {
      %cst_10 = arith.constant 0.000000e+00 : f32
      %12 = vector.broadcast %cst_10 : f32 to vector<256x128xf32>
      %c0_11 = arith.constant 0 : index
      %c0_12 = arith.constant 0 : index
      %13 = vector.load %arg6[%c0_11, %c0_12] : memref<256x128xf32, #tpu.memory_space<vmem>>, vector<256x128xf32>
      tpu.vector_store %arg6[%c0_11, %c0_12], %12 {strides = array<i32>} : memref<256x128xf32, #tpu.memory_space<vmem>>, vector<256x128xf32>,
    } else {
    }
    %c0 = arith.constant 0 : index
    %c0_1 = arith.constant 0 : index
    %3 = vector.load %arg6[%c0, %c0_1] : memref<256x128xf32, #tpu.memory_space<vmem>>, vector<256x128xf32>
    %c0_2 = arith.constant 0 : index
    %c0_3 = arith.constant 0 : index
    %4 = vector.load %arg2[%c0_2, %c0_3] : memref<256x128xbf16, #tpu.memory_space<vmem>>, vector<256x128xbf16>
    %c0_4 = arith.constant 0 : index
    %c0_5 = arith.constant 0 : index
    %5 = vector.load %arg3[%c0_4, %c0_5] : memref<128x128xbf16, #tpu.memory_space<vmem>>, vector<128x128xbf16>
    %cst = arith.constant dense<0.000000e+00> : vector<256x128xf32>
    %6 = tpu.matmul %4, %5, %cst {dimension_numbers = #tpu.dot_dimension_numbers<[1], [0], [0], [1], [0, 0, 1, 1], [], []>} : vector<256x128xbf16>, vector<128x128xbf16>, vector<256x128xf32> -> vector<256x128xf32>
    %7 = arith.addf %3, %6 : vector<256x128xf32>
    %c0_6 = arith.constant 0 : index
    %c0_7 = arith.constant 0 : index
    %8 = vector.load %arg6[%c0_6, %c0_7] : memref<256x128xf32, #tpu.memory_space<vmem>>, vector<256x128xf32>
    tpu.vector_store %arg6[%c0_6, %c0_7], %7 {strides = array<i32>} : memref<256x128xf32, #tpu.memory_space<vmem>>, vector<256x128xf32>,
    %c0_i32_8 = arith.constant 0 : i32
    %9 = arith.cmpi eq, %arg1, %c0_i32_8 : i32
    %10 = arith.extui %9 : i1 to i32
    %c0_i32_9 = arith.constant 0 : i32
    %11 = arith.cmpi ne, %10, %c0_i32_9 : i32
    scf.if %11 {
      %c0_10 = arith.constant 0 : index
      %c0_11 = arith.constant 0 : index
      %12 = vector.load %arg6[%c0_10, %c0_11] : memref<256x128xf32, #tpu.memory_space<vmem>>, vector<256x128xf32>
      %c0_12 = arith.constant 0 : index
      %c0_13 = arith.constant 0 : index
      %13 = vector.load %arg4[%c0_12, %c0_13] : memref<1x128xf32, #tpu.memory_space<vmem>>, vector<1x128xf32>
      %14 = vector.broadcast %13 : vector<1x128xf32> to vector<256x128xf32>
      %15 = arith.addf %12, %14 : vector<256x128xf32>
      %16 = arith.truncf %15 : vector<256x128xf32> to vector<256x128xbf16>
      %c0_14 = arith.constant 0 : index
      %c0_15 = arith.constant 0 : index
      %17 = vector.load %arg5[%c0_14, %c0_15] : memref<256x128xbf16, #tpu.memory_space<vmem>>, vector<256x128xbf16>
      tpu.vector_store %arg5[%c0_14, %c0_15], %16 {strides = array<i32>} : memref<256x128xbf16, #tpu.memory_space<vmem>>, vector<256x128xbf16>,
    } else {
    }
    return
  }
  func.func @transform_0(%arg0: i32, %arg1: i32) -> (i32, i32) {
    %c0_i32 = arith.constant 0 : i32
    return %arg0, %arg1 : i32, i32
  }
  func.func @transform_1(%arg0: i32, %arg1: i32) -> (i32, i32) {
    %c0_i32 = arith.constant 0 : i32
    %c0_i32_0 = arith.constant 0 : i32
    return %arg1, %c0_i32 : i32, i32
  }
  func.func @transform_2(%arg0: i32, %arg1: i32) -> (i32, i32) {
    %c0_i32 = arith.constant 0 : i32
    %c0_i32_0 = arith.constant 0 : i32
    %c0_i32_1 = arith.constant 0 : i32
    return %c0_i32, %c0_i32_0 : i32, i32
  }
  func.func @transform_3(%arg0: i32, %arg1: i32) -> (i32, i32) {
    %c0_i32 = arith.constant 0 : i32
    %c0_i32_0 = arith.constant 0 : i32
    return %arg0, %c0_i32 : i32, i32
  }
}

</mosaic_0001>

<llo_original>
// kernel: tpu_custom_call.1
$region0: #{tpu_custom_call.1}
  #allocation0 [shape = 'u32[]', space=smem, size = 0x4, offset = 0x4, fixed_abs, tag = 'smem constant byte address 0x4 - core index']
  #allocation1 [shape = 'u32[72,128]{1,0:T(1,128)}', space=vmem, size = 0x9000, scoped, tag = 'internal scratch']
  #allocation2 [shape = 'f32[256,128]{1,0:T(8,128)}', space=vmem, size = 0x20000, scoped, tag = 'scratch operand']
  %s0 = inlined_call_operand.hbm [shape: bf16[2048,128], index: 0, kind: input, shape index: {}]
  %s1 = inlined_call_operand.hbm [shape: bf16[128,128], index: 1, kind: input, shape index: {}]
  %s2 = inlined_call_operand.vmem [shape: f32[1,128], index: 2, kind: input, shape index: {}]
  %s3 = inlined_call_operand.hbm [shape: bf16[2048,128], index: 3, kind: output, shape index: {}]
  %s4 = sld [smem:[#allocation0]]
  $region61: #{tpu_custom_call.1} parent=0
    _
  %s6 = ssub.s32 1, %s4
  %s7 = scalar_select 0, %s6, %s4
  $region1: #{tpu_custom_call.1} parent=0
    #allocation3 [shape = 'u8[131072]{0}', space=vmem, size = 0x20000, scoped, tag = 'input window, operand 0']
    #allocation4 [shape = 's32[2]{0}', space=sflag, size = 0x8, scoped, tag = 'scoped memory for tpu_custom_call.1']
    #allocation5 [shape = 's32[2]{0}', space=sflag, size = 0x8, scoped, tag = 'scoped memory for tpu_custom_call.1']
    #allocation6 [shape = 'u8[32768]{0}', space=vmem, size = 0x8000, scoped, tag = 'input window, operand 1, single buffered']
    #allocation7 [shape = 's32[1]{0}', space=sflag, size = 0x4, scoped, tag = 'scoped memory for tpu_custom_call.1']
    #allocation8 [shape = 'u8[131072]{0}', space=vmem, size = 0x20000, scoped, tag = 'output window, operand 0']
    %8 = vsyncpa [#allocation4], 0
    %s9 = scalar_lea.sflag [#allocation4], 1
    %10 = vsyncpa %s9, 0
    %11 = vsyncpa [#allocation7], 0
    %12 = vsyncpa [#allocation5], 0
    %s13 = scalar_lea.sflag [#allocation5], 1
    %14 = vsyncpa %s13, 0
    loop: start=0, step=1, limit=10
    $region2: #{tpu_custom_call.1} parent=1 // loop_pre_header
      _
    $region3: #{tpu_custom_call.1} parent=1 // loop_header
      %s16 = sphi 0, %s20
      %p17 = scmp.ge.s32.totalorder %s16, 10
      %s23 = sphi 0, %s35
      %s24 = sphi 0, %s31
      %s25 = sphi 0, %s23
      %s26 = sphi 0, %s24
      %s27 = sphi 0, %s25
      %s28 = sphi 0, %s26
      %s40 = sphi 0, %s42
      %s43 = sphi 0, %s40
      %s44 = sphi 0, %s43
      %s60 = sphi 0, %s44
      %s66 = sphi 0, %s68
      %s69 = sphi 0, %s66
      %s70 = sphi 0, %s69
      %s86 = sphi 0, %s70
      %s90 = sphi 0, %s90
      %s92 = sphi 0, %s90
      %s93 = sphi 0, %s92
      %s107 = sphi 0, %s93
      %s113 = sphi 0, %s115
      %s116 = sphi 0, %s113
      %s117 = sphi 0, %s116
      %s133 = sphi 0, %s117
    $region4: #{tpu_custom_call.1} parent=1 // loop_header_branch
      %19 = sbr.rel (%p17) target = $region8
    $region5: #{tpu_custom_call.1} parent=1 // loop_body
      %s21 = ssub.s32 %s16, 1
      %s22 = ssub.s32 %s16, 2
      %s29 = sadd.s32 1, %s24
      %p30 = scmp.ge.s32.totalorder %s29, 1
      %s31 = scalar_select %p30, 0, %s29
      %s32 = sadd.s32 1, %s23
      %s33 = scalar_select %p30, %s32, %s23
      %p34 = scmp.ge.s32.totalorder %s33, 8
      %s35 = scalar_select %p34, 0, %s33
      %s36 = ssub.s32 %s23, %s35
      %s37 = ssub.s32 %s24, %s31
      %s38 = sor.u32 %s36, %s37
      %p39 = scmp.eq.s32.totalorder %s38, 0
      %s41 = sadd.s32 %s40, 1
      %s42 = scalar_select %p39, %s40, %s41
      %p45 = pneg %p39
      %p46 = scmp.eq.s32.totalorder %s16, 7
      %p47 = por %p45, %p46
      %p48 = scmp.ne.s32.totalorder %s40, %s43
      %p49 = scmp.eq.s32.totalorder %s16, 0
      %p50 = por %p48, %p49
      %p51 = scmp.ne.s32.totalorder %s40, %s43
      %p52 = scmp.eq.s32.totalorder %s21, 7
      %p53 = por %p51, %p52
      %p54 = scmp.ne.s32.totalorder %s43, %s44
      %p55 = scmp.eq.s32.totalorder %s21, 0
      %p56 = por %p54, %p55
      %p57 = scmp.ne.s32.totalorder %s43, %s44
      %p58 = scmp.eq.s32.totalorder %s22, 7
      %p59 = por %p57, %p58
      %p61 = scmp.ne.s32.totalorder %s44, %s60
      %p62 = scmp.eq.s32.totalorder %s22, 0
      %p63 = por %p61, %p62
      %s64 = ssub.s32 %s24, %s31
      %p65 = scmp.eq.s32.totalorder %s64, 0
      %s67 = sadd.s32 %s66, 1
      %s68 = scalar_select %p65, %s66, %s67
      %p71 = pneg %p65
      %p72 = scmp.eq.s32.totalorder %s16, 7
      %p73 = por %p71, %p72
      %p74 = scmp.ne.s32.totalorder %s66, %s69
      %p75 = scmp.eq.s32.totalorder %s16, 0
      %p76 = por %p74, %p75
      %p77 = scmp.ne.s32.totalorder %s66, %s69
      %p78 = scmp.eq.s32.totalorder %s21, 7
      %p79 = por %p77, %p78
      %p80 = scmp.ne.s32.totalorder %s69, %s70
      %p81 = scmp.eq.s32.totalorder %s21, 0
      %p82 = por %p80, %p81
      %p83 = scmp.ne.s32.totalorder %s69, %s70
      %p84 = scmp.eq.s32.totalorder %s22, 7
      %p85 = por %p83, %p84
      %p87 = scmp.ne.s32.totalorder %s70, %s86
      %p88 = scmp.eq.s32.totalorder %s22, 0
      %p89 = por %p87, %p88
      %s91 = sadd.s32 %s90, 1
      %p94 = scmp.eq.s32.totalorder %s16, 7
      %p95 = scmp.ne.s32.totalorder %s90, %s92
      %p96 = scmp.eq.s32.totalorder %s16, 0
      %p97 = por %p95, %p96
      %p98 = scmp.ne.s32.totalorder %s90, %s92
      %p99 = scmp.eq.s32.totalorder %s21, 7
      %p100 = por %p98, %p99
      %p101 = scmp.ne.s32.totalorder %s92, %s93
      %p102 = scmp.eq.s32.totalorder %s21, 0
      %p103 = por %p101, %p102
      %p104 = scmp.ne.s32.totalorder %s92, %s93
      %p105 = scmp.eq.s32.totalorder %s22, 7
      %p106 = por %p104, %p105
      %p108 = scmp.ne.s32.totalorder %s93, %s107
      %p109 = scmp.eq.s32.totalorder %s22, 0
      %p110 = por %p108, %p109
      %s111 = ssub.s32 %s23, %s35
      %p112 = scmp.eq.s32.totalorder %s111, 0
      %s114 = sadd.s32 %s113, 1
      %s115 = scalar_select %p112, %s113, %s114
      %p118 = pneg %p112
      %p119 = scmp.eq.s32.totalorder %s16, 7
      %p120 = por %p118, %p119
      %p121 = scmp.ne.s32.totalorder %s113, %s116
      %p122 = scmp.eq.s32.totalorder %s16, 0
      %p123 = por %p121, %p122
      %p124 = scmp.ne.s32.totalorder %s113, %s116
      %p125 = scmp.eq.s32.totalorder %s21, 7
      %p126 = por %p124, %p125
      %p127 = scmp.ne.s32.totalorder %s116, %s117
      %p128 = scmp.eq.s32.totalorder %s21, 0
      %p129 = por %p127, %p128
      %p130 = scmp.ne.s32.totalorder %s116, %s117
      %p131 = scmp.eq.s32.totalorder %s22, 7
      %p132 = por %p130, %p131
      %p134 = scmp.ne.s32.totalorder %s117, %s133
      %p135 = scmp.eq.s32.totalorder %s22, 0
      %p136 = por %p134, %p135
      %p137 = scmp.le.s32.totalorder 1, %s16
      %p138 = scmp.lt.s32.totalorder %s16, 9
      %p139 = pnand %p137, %p138
      %p140 = pneg %p139
      // Predicated region
      $region9: #{tpu_custom_call.1} parent=5 // pred_check
        _
      $region10: #{tpu_custom_call.1} parent=5 // pred_check_branch
        %142 = sbr.rel (%p139) target = $region12
      $region11: #{tpu_custom_call.1} parent=5 // pred_region
        %s143 = ssub.s32 %s16, 1
        // Predicated region
        $region13: #{tpu_custom_call.1} parent=11 // pred_check
          %p144 = pneg %p82
        $region14: #{tpu_custom_call.1} parent=11 // pred_check_branch
          %146 = sbr.rel (%p144) target = $region16
        $region15: #{tpu_custom_call.1} parent=11 // pred_region
          %s147 = smul.u32 16, %s26
          %149 = vsyncadd [#allocation7], 0
          %s150 = smul.addr %s147, 4
          %s151 = scalar_lea.hbm %s1, %s150
          %s152 = sshll.u32 %s151, 4
          %s153 = int_to_ptr.hbm [resolvable:$true] %s152
          %s154 = sshll.u32 [#allocation6], 4
          %s155 = int_to_ptr.vmem [resolvable:$true] %s154
          %160 = dma.hbm_to_vmem [thread:$0]  %s153, 1024, %s155, [#allocation7], 64, 64, 4
        $region16: #{tpu_custom_call.1} parent=11 // pred_fallthru
          _
        // Predicated region
        $region17: #{tpu_custom_call.1} parent=11 // pred_check
          %p161 = pneg %p103
        $region18: #{tpu_custom_call.1} parent=11 // pred_check_branch
          %163 = sbr.rel (%p161) target = $region20
        $region19: #{tpu_custom_call.1} parent=11 // pred_region
          _
        $region20: #{tpu_custom_call.1} parent=11 // pred_fallthru
          _
      $region12: #{tpu_custom_call.1} parent=5 // pred_fallthru
        _
      %p164 = scmp.lt.s32.totalorder %s16, 8
      // Predicated region
      $region21: #{tpu_custom_call.1} parent=5 // pred_check
        %p165 = pneg %p164
      $region22: #{tpu_custom_call.1} parent=5 // pred_check_branch
        %167 = sbr.rel (%p165) target = $region24
      $region23: #{tpu_custom_call.1} parent=5 // pred_region
        // Predicated region
        $region25: #{tpu_custom_call.1} parent=23 // pred_check
          %p168 = pneg %p50
        $region26: #{tpu_custom_call.1} parent=23 // pred_check_branch
          %170 = sbr.rel (%p168) target = $region28
        $region27: #{tpu_custom_call.1} parent=23 // pred_region
          %s171 = sand.u32 %s40, 1
          %s172 = scalar_lea.sflag [#allocation4], %s171
          %s173 = sand.u32 %s40, 1
          %s174 = smul.addr %s173, 128
          %s175 = scalar_lea.vmem [#allocation3], %s174
          %s176 = smul.u32 32, %s23
          %178 = vsyncadd %s172, 0
          %s179 = sadd.s32 %s24, %s176
          %s180 = smul.addr %s179, 4
          %s181 = scalar_lea.hbm %s0, %s180
          %s182 = sshll.u32 %s181, 4
          %s183 = int_to_ptr.hbm [resolvable:$true] %s182
          %s184 = sshll.u32 %s175, 4
          %s185 = int_to_ptr.vmem [resolvable:$true] %s184
          %190 = dma.hbm_to_vmem [thread:$0]  %s183, 2048, %s185, %s172, 64, 64, 4
        $region28: #{tpu_custom_call.1} parent=23 // pred_fallthru
          _
      $region24: #{tpu_custom_call.1} parent=5 // pred_fallthru
        _
      %p191 = scmp.le.s32.totalorder 1, %s16
      %p192 = scmp.lt.s32.totalorder %s16, 9
      %p193 = pnand %p191, %p192
      %p194 = pneg %p193
      // Predicated region
      $region29: #{tpu_custom_call.1} parent=5 // pred_check
        _
      $region30: #{tpu_custom_call.1} parent=5 // pred_check_branch
        %196 = sbr.rel (%p193) target = $region32
      $region31: #{tpu_custom_call.1} parent=5 // pred_region
        %s197 = ssub.s32 %s16, 1
        %s198 = sand.u32 %s43, 1
        %s199 = scalar_lea.sflag [#allocation4], %s198
        %s200 = sand.u32 %s43, 1
        %s201 = smul.addr %s200, 128
        %s202 = scalar_lea.vmem [#allocation3], %s201
        // Predicated region
        $region33: #{tpu_custom_call.1} parent=31 // pred_check
          %p203 = pneg %p56
        $region34: #{tpu_custom_call.1} parent=31 // pred_check_branch
          %205 = sbr.rel (%p203) target = $region36
        $region35: #{tpu_custom_call.1} parent=31 // pred_region
          %207 = dma.done %s199, 2048
        $region36: #{tpu_custom_call.1} parent=31 // pred_fallthru
          _
        // Predicated region
        $region37: #{tpu_custom_call.1} parent=31 // pred_check
          %p208 = pneg %p82
        $region38: #{tpu_custom_call.1} parent=31 // pred_check_branch
          %210 = sbr.rel (%p208) target = $region40
        $region39: #{tpu_custom_call.1} parent=31 // pred_region
          %212 = dma.done [#allocation7], 1024
        $region40: #{tpu_custom_call.1} parent=31 // pred_fallthru
          _
        %s213 = sand.u32 %s43, 1
        %s214 = scalar_lea.sflag [#allocation4], %s213
        %s215 = sand.u32 %s43, 1
        %s216 = smul.addr %s215, 128
        %s217 = scalar_lea.vmem [#allocation3], %s216
        %p218 = pneg %p56
        %p219 = pneg %p53
        %p220 = pneg %p82
        %p221 = pneg %p79
        %p222 = pneg %p103
        %p223 = pneg %p100
        %p224 = pneg %p129
        %p225 = pneg %p126
        %s226 = sand.u32 %s116, 1
        %s227 = scalar_lea.sflag [#allocation5], %s226
        %s228 = sand.u32 %s116, 1
        %s229 = smul.addr %s228, 128
        %s230 = scalar_lea.vmem [#allocation8], %s229
        %s231 = smul.u32 32, %s25
        %s232 = smul.u32 16, %s26
        %s233 = smul.u32 32, %s25
        %p234 = scmp.eq.s32.totalorder %s26, 0
        // Predicated region
        $region41: #{tpu_custom_call.1} parent=31 // pred_check
          %p235 = pneg %p234
        $region42: #{tpu_custom_call.1} parent=31 // pred_check_branch
          %237 = sbr.rel (%p235) target = $region44
        $region43: #{tpu_custom_call.1} parent=31 // pred_region
          %238 = vst [vmem:[#allocation2] sm:$0xff] 0.0
          %239 = vst [vmem:[#allocation2 + $0x8] sm:$0xff] 0.0
          %240 = vst [vmem:[#allocation2 + $0x10] sm:$0xff] 0.0
          %241 = vst [vmem:[#allocation2 + $0x18] sm:$0xff] 0.0
          %242 = vst [vmem:[#allocation2 + $0x20] sm:$0xff] 0.0
          %243 = vst [vmem:[#allocation2 + $0x28] sm:$0xff] 0.0
          %244 = vst [vmem:[#allocation2 + $0x30] sm:$0xff] 0.0
          %245 = vst [vmem:[#allocation2 + $0x38] sm:$0xff] 0.0
          %246 = vst [vmem:[#allocation2 + $0x40] sm:$0xff] 0.0
          %247 = vst [vmem:[#allocation2 + $0x48] sm:$0xff] 0.0
          %248 = vst [vmem:[#allocation2 + $0x50] sm:$0xff] 0.0
          %249 = vst [vmem:[#allocation2 + $0x58] sm:$0xff] 0.0
          %250 = vst [vmem:[#allocation2 + $0x60] sm:$0xff] 0.0
          %251 = vst [vmem:[#allocation2 + $0x68] sm:$0xff] 0.0
          %252 = vst [vmem:[#allocation2 + $0x70] sm:$0xff] 0.0
          %253 = vst [vmem:[#allocation2 + $0x78] sm:$0xff] 0.0
          %254 = vst [vmem:[#allocation2 + $0x80] sm:$0xff] 0.0
          %255 = vst [vmem:[#allocation2 + $0x88] sm:$0xff] 0.0
          %256 = vst [vmem:[#allocation2 + $0x90] sm:$0xff] 0.0
          %257 = vst [vmem:[#allocation2 + $0x98] sm:$0xff] 0.0
          %258 = vst [vmem:[#allocation2 + $0xa0] sm:$0xff] 0.0
          %259 = vst [vmem:[#allocation2 + $0xa8] sm:$0xff] 0.0
          %260 = vst [vmem:[#allocation2 + $0xb0] sm:$0xff] 0.0
          %261 = vst [vmem:[#allocation2 + $0xb8] sm:$0xff] 0.0
          %262 = vst [vmem:[#allocation2 + $0xc0] sm:$0xff] 0.0
          %263 = vst [vmem:[#allocation2 + $0xc8] sm:$0xff] 0.0
          %264 = vst [vmem:[#allocation2 + $0xd0] sm:$0xff] 0.0
          %265 = vst [vmem:[#allocation2 + $0xd8] sm:$0xff] 0.0
          %266 = vst [vmem:[#allocation2 + $0xe0] sm:$0xff] 0.0
          %267 = vst [vmem:[#allocation2 + $0xe8] sm:$0xff] 0.0
          %268 = vst [vmem:[#allocation2 + $0xf0] sm:$0xff] 0.0
          %269 = vst [vmem:[#allocation2 + $0xf8] sm:$0xff] 0.0
        $region44: #{tpu_custom_call.1} parent=31 // pred_fallthru
          _
        %v270 = vld [vmem:[#allocation2] sm:$0xff]
        %v271 = vld [vmem:[#allocation2 + $0x8] sm:$0xff]
        %v272 = vld [vmem:[#allocation2 + $0x10] sm:$0xff]
        %v273 = vld [vmem:[#allocation2 + $0x18] sm:$0xff]
        %v274 = vld [vmem:[#allocation2 + $0x20] sm:$0xff]
        %v275 = vld [vmem:[#allocation2 + $0x28] sm:$0xff]
        %v276 = vld [vmem:[#allocation2 + $0x30] sm:$0xff]
        %v277 = vld [vmem:[#allocation2 + $0x38] sm:$0xff]
        %v278 = vld [vmem:[#allocation2 + $0x40] sm:$0xff]
        %v279 = vld [vmem:[#allocation2 + $0x48] sm:$0xff]
        %v280 = vld [vmem:[#allocation2 + $0x50] sm:$0xff]
        %v281 = vld [vmem:[#allocation2 + $0x58] sm:$0xff]
        %v282 = vld [vmem:[#allocation2 + $0x60] sm:$0xff]
        %v283 = vld [vmem:[#allocation2 + $0x68] sm:$0xff]
        %v284 = vld [vmem:[#allocation2 + $0x70] sm:$0xff]
        %v285 = vld [vmem:[#allocation2 + $0x78] sm:$0xff]
        %v286 = vld [vmem:[#allocation2 + $0x80] sm:$0xff]
        %v287 = vld [vmem:[#allocation2 + $0x88] sm:$0xff]
        %v288 = vld [vmem:[#allocation2 + $0x90] sm:$0xff]
        %v289 = vld [vmem:[#allocation2 + $0x98] sm:$0xff]
        %v290 = vld [vmem:[#allocation2 + $0xa0] sm:$0xff]
        %v291 = vld [vmem:[#allocation2 + $0xa8] sm:$0xff]
        %v292 = vld [vmem:[#allocation2 + $0xb0] sm:$0xff]
        %v293 = vld [vmem:[#allocation2 + $0xb8] sm:$0xff]
        %v294 = vld [vmem:[#allocation2 + $0xc0] sm:$0xff]
        %v295 = vld [vmem:[#allocation2 + $0xc8] sm:$0xff]
        %v296 = vld [vmem:[#allocation2 + $0xd0] sm:$0xff]
        %v297 = vld [vmem:[#allocation2 + $0xd8] sm:$0xff]
        %v298 = vld [vmem:[#allocation2 + $0xe0] sm:$0xff]
        %v299 = vld [vmem:[#allocation2 + $0xe8] sm:$0xff]
        %v300 = vld [vmem:[#allocation2 + $0xf0] sm:$0xff]
        %v301 = vld [vmem:[#allocation2 + $0xf8] sm:$0xff]
        %v302 = vld [vmem:[%s202] sm:$0xf]
        %v303 = vld [vmem:[%s202 + $0x4] sm:$0xf]
        %v304 = vld [vmem:[%s202 + $0x8] sm:$0xf]
        %v305 = vld [vmem:[%s202 + $0xc] sm:$0xf]
        %v306 = vld [vmem:[%s202 + $0x10] sm:$0xf]
        %v307 = vld [vmem:[%s202 + $0x14] sm:$0xf]
        %v308 = vld [vmem:[%s202 + $0x18] sm:$0xf]
        %v309 = vld [vmem:[%s202 + $0x1c] sm:$0xf]
        %v310 = vld [vmem:[%s202 + $0x20] sm:$0xf]
        %v311 = vld [vmem:[%s202 + $0x24] sm:$0xf]
        %v312 = vld [vmem:[%s202 + $0x28] sm:$0xf]
        %v313 = vld [vmem:[%s202 + $0x2c] sm:$0xf]
        %v314 = vld [vmem:[%s202 + $0x30] sm:$0xf]
        %v315 = vld [vmem:[%s202 + $0x34] sm:$0xf]
        %v316 = vld [vmem:[%s202 + $0x38] sm:$0xf]
        %v317 = vld [vmem:[%s202 + $0x3c] sm:$0xf]
        %v318 = vld [vmem:[%s202 + $0x40] sm:$0xf]
        %v319 = vld [vmem:[%s202 + $0x44] sm:$0xf]
        %v320 = vld [vmem:[%s202 + $0x48] sm:$0xf]
        %v321 = vld [vmem:[%s202 + $0x4c] sm:$0xf]
        %v322 = vld [vmem:[%s202 + $0x50] sm:$0xf]
        %v323 = vld [vmem:[%s202 + $0x54] sm:$0xf]
        %v324 = vld [vmem:[%s202 + $0x58] sm:$0xf]
        %v325 = vld [vmem:[%s202 + $0x5c] sm:$0xf]
        %v326 = vld [vmem:[%s202 + $0x60] sm:$0xf]
        %v327 = vld [vmem:[%s202 + $0x64] sm:$0xf]
        %v328 = vld [vmem:[%s202 + $0x68] sm:$0xf]
        %v329 = vld [vmem:[%s202 + $0x6c] sm:$0xf]
        %v330 = vld [vmem:[%s202 + $0x70] sm:$0xf]
        %v331 = vld [vmem:[%s202 + $0x74] sm:$0xf]
        %v332 = vld [vmem:[%s202 + $0x78] sm:$0xf]
        %v333 = vld [vmem:[%s202 + $0x7c] sm:$0xf]
        %v334 = vld [vmem:[#allocation6] sm:$0xf]
        %v335 = vld [vmem:[#allocation6 + $0x4] sm:$0xf]
        %v336 = vld [vmem:[#allocation6 + $0x8] sm:$0xf]
        %v337 = vld [vmem:[#allocation6 + $0xc] sm:$0xf]
        %v338 = vld [vmem:[#allocation6 + $0x10] sm:$0xf]
        %v339 = vld [vmem:[#allocation6 + $0x14] sm:$0xf]
        %v340 = vld [vmem:[#allocation6 + $0x18] sm:$0xf]
        %v341 = vld [vmem:[#allocation6 + $0x1c] sm:$0xf]
        %v342 = vld [vmem:[#allocation6 + $0x20] sm:$0xf]
        %v343 = vld [vmem:[#allocation6 + $0x24] sm:$0xf]
        %v344 = vld [vmem:[#allocation6 + $0x28] sm:$0xf]
        %v345 = vld [vmem:[#allocation6 + $0x2c] sm:$0xf]
        %v346 = vld [vmem:[#allocation6 + $0x30] sm:$0xf]
        %v347 = vld [vmem:[#allocation6 + $0x34] sm:$0xf]
        %v348 = vld [vmem:[#allocation6 + $0x38] sm:$0xf]
        %v349 = vld [vmem:[#allocation6 + $0x3c] sm:$0xf]
        %v382 = vunpack.c.l.b16 %v302
        %v383 = vunpack.c.l.b16 %v303
        %v384 = vunpack.c.l.b16 %v304
        %v385 = vunpack.c.l.b16 %v305
        %v386 = vunpack.c.l.b16 %v306
        %v387 = vunpack.c.l.b16 %v307
        %v388 = vunpack.c.l.b16 %v308
        %v389 = vunpack.c.l.b16 %v309
        %v390 = vunpack.c.l.b16 %v310
        %v391 = vunpack.c.l.b16 %v311
        %v392 = vunpack.c.l.b16 %v312
        %v393 = vunpack.c.l.b16 %v313
        %v394 = vunpack.c.l.b16 %v314
        %v395 = vunpack.c.l.b16 %v315
        %v396 = vunpack.c.l.b16 %v316
        %v397 = vunpack.c.l.b16 %v317
        %v398 = vunpack.c.l.b16 %v318
        %v399 = vunpack.c.l.b16 %v319
        %v400 = vunpack.c.l.b16 %v320
        %v401 = vunpack.c.l.b16 %v321
        %v402 = vunpack.c.l.b16 %v322
        %v403 = vunpack.c.l.b16 %v323
        %v404 = vunpack.c.l.b16 %v324
        %v405 = vunpack.c.l.b16 %v325
        %v406 = vunpack.c.l.b16 %v326
        %v407 = vunpack.c.l.b16 %v327
        %v408 = vunpack.c.l.b16 %v328
        %v409 = vunpack.c.l.b16 %v329
        %v410 = vunpack.c.l.b16 %v330
        %v411 = vunpack.c.l.b16 %v331
        %v412 = vunpack.c.l.b16 %v332
        %v413 = vunpack.c.l.b16 %v333
        %v414 = vpack.c.b16 %v383, %v382
        %v415 = vpack.c.b16 %v385, %v384
        %v416 = vpack.c.b16 %v387, %v386
        %v417 = vpack.c.b16 %v389, %v388
        %v418 = vpack.c.b16 %v391, %v390
        %v419 = vpack.c.b16 %v393, %v392
        %v420 = vpack.c.b16 %v395, %v394
        %v421 = vpack.c.b16 %v397, %v396
        %v422 = vpack.c.b16 %v399, %v398
        %v423 = vpack.c.b16 %v401, %v400
        %v424 = vpack.c.b16 %v403, %v402
        %v425 = vpack.c.b16 %v405, %v404
        %v426 = vpack.c.b16 %v407, %v406
        %v427 = vpack.c.b16 %v409, %v408
        %v428 = vpack.c.b16 %v411, %v410
        %v429 = vpack.c.b16 %v413, %v412
        %v462 = vunpack.c.l.b16 %v334
        %v463 = vunpack.c.l.b16 %v335
        %v464 = vunpack.c.l.b16 %v336
        %v465 = vunpack.c.l.b16 %v337
        %v466 = vunpack.c.l.b16 %v338
        %v467 = vunpack.c.l.b16 %v339
        %v468 = vunpack.c.l.b16 %v340
        %v469 = vunpack.c.l.b16 %v341
        %v470 = vunpack.c.l.b16 %v342
        %v471 = vunpack.c.l.b16 %v343
        %v472 = vunpack.c.l.b16 %v344
        %v473 = vunpack.c.l.b16 %v345
        %v474 = vunpack.c.l.b16 %v346
        %v475 = vunpack.c.l.b16 %v347
        %v476 = vunpack.c.l.b16 %v348
        %v477 = vunpack.c.l.b16 %v349
        %v478 = vpack.c.b16 %v463, %v462
        %v479 = vpack.c.b16 %v465, %v464
        %v480 = vpack.c.b16 %v467, %v466
        %v481 = vpack.c.b16 %v469, %v468
        %v482 = vpack.c.b16 %v471, %v470
        %v483 = vpack.c.b16 %v473, %v472
        %v484 = vpack.c.b16 %v475, %v474
        %v485 = vpack.c.b16 %v477, %v476
        %494 = vmatpush.bf16.msra.mxu0 %v485
        %495 = vmatpush.bf16.msra.mxu0 %v484
        %496 = vmatpush.bf16.msra.mxu0 %v483
        %497 = vmatpush.bf16.msra.mxu0 %v482
        %498 = vmatpush.bf16.msra.mxu0 %v481
        %499 = vmatpush.bf16.msra.mxu0 %v480
        %500 = vmatpush.bf16.msra.mxu0 %v479
        %501 = vmatpush.bf16.msra.mxu0 %v478
        %502 = vmatmul.bf16.gmra.mxu0 %v414
        %v503 = vpop.f32.mrf.mxu0
        %v504 = vadd.f32 0.0, %v503
        %v505 = vpop.f32.mrf.mxu0
        %v506 = vadd.f32 0.0, %v505
        %507 = vmatmul.bf16.gmra.mxu0 %v415
        %v508 = vpop.f32.mrf.mxu0
        %v509 = vadd.f32 0.0, %v508
        %v510 = vpop.f32.mrf.mxu0
        %v511 = vadd.f32 0.0, %v510
        %512 = vmatmul.bf16.gmra.mxu0 %v416
        %v513 = vpop.f32.mrf.mxu0
        %v514 = vadd.f32 0.0, %v513
        %v515 = vpop.f32.mrf.mxu0
        %v516 = vadd.f32 0.0, %v515
        %517 = vmatmul.bf16.gmra.mxu0 %v417
        %v518 = vpop.f32.mrf.mxu0
        %v519 = vadd.f32 0.0, %v518
        %v520 = vpop.f32.mrf.mxu0
        %v521 = vadd.f32 0.0, %v520
        %522 = vmatmul.bf16.gmra.mxu0 %v418
        %v523 = vpop.f32.mrf.mxu0
        %v524 = vadd.f32 0.0, %v523
        %v525 = vpop.f32.mrf.mxu0
        %v526 = vadd.f32 0.0, %v525
        %527 = vmatmul.bf16.gmra.mxu0 %v419
        %v528 = vpop.f32.mrf.mxu0
        %v529 = vadd.f32 0.0, %v528
        %v530 = vpop.f32.mrf.mxu0
        %v531 = vadd.f32 0.0, %v530
        %532 = vmatmul.bf16.gmra.mxu0 %v420
        %v533 = vpop.f32.mrf.mxu0
        %v534 = vadd.f32 0.0, %v533
        %v535 = vpop.f32.mrf.mxu0
        %v536 = vadd.f32 0.0, %v535
        %537 = vmatmul.bf16.gmra.mxu0 %v421
        %v538 = vpop.f32.mrf.mxu0
        %v539 = vadd.f32 0.0, %v538
        %v540 = vpop.f32.mrf.mxu0
        %v541 = vadd.f32 0.0, %v540
        %542 = vmatmul.bf16.gmra.mxu0 %v422
        %v543 = vpop.f32.mrf.mxu0
        %v544 = vadd.f32 0.0, %v543
        %v545 = vpop.f32.mrf.mxu0
        %v546 = vadd.f32 0.0, %v545
        %547 = vmatmul.bf16.gmra.mxu0 %v423
        %v548 = vpop.f32.mrf.mxu0
        %v549 = vadd.f32 0.0, %v548
        %v550 = vpop.f32.mrf.mxu0
        %v551 = vadd.f32 0.0, %v550
        %552 = vmatmul.bf16.gmra.mxu0 %v424
        %v553 = vpop.f32.mrf.mxu0
        %v554 = vadd.f32 0.0, %v553
        %v555 = vpop.f32.mrf.mxu0
        %v556 = vadd.f32 0.0, %v555
        %557 = vmatmul.bf16.gmra.mxu0 %v425
        %v558 = vpop.f32.mrf.mxu0
        %v559 = vadd.f32 0.0, %v558
        %v560 = vpop.f32.mrf.mxu0
        %v561 = vadd.f32 0.0, %v560
        %562 = vmatmul.bf16.gmra.mxu0 %v426
        %v563 = vpop.f32.mrf.mxu0
        %v564 = vadd.f32 0.0, %v563
        %v565 = vpop.f32.mrf.mxu0
        %v566 = vadd.f32 0.0, %v565
        %567 = vmatmul.bf16.gmra.mxu0 %v427
        %v568 = vpop.f32.mrf.mxu0
        %v569 = vadd.f32 0.0, %v568
        %v570 = vpop.f32.mrf.mxu0
        %v571 = vadd.f32 0.0, %v570
        %572 = vmatmul.bf16.gmra.mxu0 %v428
        %v573 = vpop.f32.mrf.mxu0
        %v574 = vadd.f32 0.0, %v573
        %v575 = vpop.f32.mrf.mxu0
        %v576 = vadd.f32 0.0, %v575
        %577 = vmatmul.bf16.gmra.mxu0 %v429
        %v578 = vpop.f32.mrf.mxu0
        %v579 = vadd.f32 0.0, %v578
        %v580 = vpop.f32.mrf.mxu0
        %v581 = vadd.f32 0.0, %v580
        %582 = vdwg.mxu0
        %v583 = vadd.f32 %v270, %v504
        %v584 = vadd.f32 %v271, %v506
        %v585 = vadd.f32 %v272, %v509
        %v586 = vadd.f32 %v273, %v511
        %v587 = vadd.f32 %v274, %v514
        %v588 = vadd.f32 %v275, %v516
        %v589 = vadd.f32 %v276, %v519
        %v590 = vadd.f32 %v277, %v521
        %v591 = vadd.f32 %v278, %v524
        %v592 = vadd.f32 %v279, %v526
        %v593 = vadd.f32 %v280, %v529
        %v594 = vadd.f32 %v281, %v531
        %v595 = vadd.f32 %v282, %v534
        %v596 = vadd.f32 %v283, %v536
        %v597 = vadd.f32 %v284, %v539
        %v598 = vadd.f32 %v285, %v541
        %v599 = vadd.f32 %v286, %v544
        %v600 = vadd.f32 %v287, %v546
        %v601 = vadd.f32 %v288, %v549
        %v602 = vadd.f32 %v289, %v551
        %v603 = vadd.f32 %v290, %v554
        %v604 = vadd.f32 %v291, %v556
        %v605 = vadd.f32 %v292, %v559
        %v606 = vadd.f32 %v293, %v561
        %v607 = vadd.f32 %v294, %v564
        %v608 = vadd.f32 %v295, %v566
        %v609 = vadd.f32 %v296, %v569
        %v610 = vadd.f32 %v297, %v571
        %v611 = vadd.f32 %v298, %v574
        %v612 = vadd.f32 %v299, %v576
        %v613 = vadd.f32 %v300, %v579
        %v614 = vadd.f32 %v301, %v581
        %615 = vst [vmem:[#allocation2] sm:$0xff] %v583
        %616 = vst [vmem:[#allocation2 + $0x8] sm:$0xff] %v584
        %617 = vst [vmem:[#allocation2 + $0x10] sm:$0xff] %v585
        %618 = vst [vmem:[#allocation2 + $0x18] sm:$0xff] %v586
        %619 = vst [vmem:[#allocation2 + $0x20] sm:$0xff] %v587
        %620 = vst [vmem:[#allocation2 + $0x28] sm:$0xff] %v588
        %621 = vst [vmem:[#allocation2 + $0x30] sm:$0xff] %v589
        %622 = vst [vmem:[#allocation2 + $0x38] sm:$0xff] %v590
        %623 = vst [vmem:[#allocation2 + $0x40] sm:$0xff] %v591
        %624 = vst [vmem:[#allocation2 + $0x48] sm:$0xff] %v592
        %625 = vst [vmem:[#allocation2 + $0x50] sm:$0xff] %v593
        %626 = vst [vmem:[#allocation2 + $0x58] sm:$0xff] %v594
        %627 = vst [vmem:[#allocation2 + $0x60] sm:$0xff] %v595
        %628 = vst [vmem:[#allocation2 + $0x68] sm:$0xff] %v596
        %629 = vst [vmem:[#allocation2 + $0x70] sm:$0xff] %v597
        %630 = vst [vmem:[#allocation2 + $0x78] sm:$0xff] %v598
        %631 = vst [vmem:[#allocation2 + $0x80] sm:$0xff] %v599
        %632 = vst [vmem:[#allocation2 + $0x88] sm:$0xff] %v600
        %633 = vst [vmem:[#allocation2 + $0x90] sm:$0xff] %v601
        %634 = vst [vmem:[#allocation2 + $0x98] sm:$0xff] %v602
        %635 = vst [vmem:[#allocation2 + $0xa0] sm:$0xff] %v603
        %636 = vst [vmem:[#allocation2 + $0xa8] sm:$0xff] %v604
        %637 = vst [vmem:[#allocation2 + $0xb0] sm:$0xff] %v605
        %638 = vst [vmem:[#allocation2 + $0xb8] sm:$0xff] %v606
        %639 = vst [vmem:[#allocation2 + $0xc0] sm:$0xff] %v607
        %640 = vst [vmem:[#allocation2 + $0xc8] sm:$0xff] %v608
        %641 = vst [vmem:[#allocation2 + $0xd0] sm:$0xff] %v609
        %642 = vst [vmem:[#allocation2 + $0xd8] sm:$0xff] %v610
        %643 = vst [vmem:[#allocation2 + $0xe0] sm:$0xff] %v611
        %644 = vst [vmem:[#allocation2 + $0xe8] sm:$0xff] %v612
        %645 = vst [vmem:[#allocation2 + $0xf0] sm:$0xff] %v613
        %646 = vst [vmem:[#allocation2 + $0xf8] sm:$0xff] %v614
        // Predicated region
        $region45: #{tpu_custom_call.1} parent=31 // pred_check
          %p647 = pneg %p234
        $region46: #{tpu_custom_call.1} parent=31 // pred_check_branch
          %649 = sbr.rel (%p647) target = $region48
        $region47: #{tpu_custom_call.1} parent=31 // pred_region
          %v650 = vld [vmem:[#allocation2] sm:$0xff]
          %v651 = vld [vmem:[#allocation2 + $0x8] sm:$0xff]
          %v652 = vld [vmem:[#allocation2 + $0x10] sm:$0xff]
          %v653 = vld [vmem:[#allocation2 + $0x18] sm:$0xff]
          %v654 = vld [vmem:[#allocation2 + $0x20] sm:$0xff]
          %v655 = vld [vmem:[#allocation2 + $0x28] sm:$0xff]
          %v656 = vld [vmem:[#allocation2 + $0x30] sm:$0xff]
          %v657 = vld [vmem:[#allocation2 + $0x38] sm:$0xff]
          %v658 = vld [vmem:[#allocation2 + $0x40] sm:$0xff]
          %v659 = vld [vmem:[#allocation2 + $0x48] sm:$0xff]
          %v660 = vld [vmem:[#allocation2 + $0x50] sm:$0xff]
          %v661 = vld [vmem:[#allocation2 + $0x58] sm:$0xff]
          %v662 = vld [vmem:[#allocation2 + $0x60] sm:$0xff]
          %v663 = vld [vmem:[#allocation2 + $0x68] sm:$0xff]
          %v664 = vld [vmem:[#allocation2 + $0x70] sm:$0xff]
          %v665 = vld [vmem:[#allocation2 + $0x78] sm:$0xff]
          %v666 = vld [vmem:[#allocation2 + $0x80] sm:$0xff]
          %v667 = vld [vmem:[#allocation2 + $0x88] sm:$0xff]
          %v668 = vld [vmem:[#allocation2 + $0x90] sm:$0xff]
          %v669 = vld [vmem:[#allocation2 + $0x98] sm:$0xff]
          %v670 = vld [vmem:[#allocation2 + $0xa0] sm:$0xff]
          %v671 = vld [vmem:[#allocation2 + $0xa8] sm:$0xff]
          %v672 = vld [vmem:[#allocation2 + $0xb0] sm:$0xff]
          %v673 = vld [vmem:[#allocation2 + $0xb8] sm:$0xff]
          %v674 = vld [vmem:[#allocation2 + $0xc0] sm:$0xff]
          %v675 = vld [vmem:[#allocation2 + $0xc8] sm:$0xff]
          %v676 = vld [vmem:[#allocation2 + $0xd0] sm:$0xff]
          %v677 = vld [vmem:[#allocation2 + $0xd8] sm:$0xff]
          %v678 = vld [vmem:[#allocation2 + $0xe0] sm:$0xff]
          %v679 = vld [vmem:[#allocation2 + $0xe8] sm:$0xff]
          %v680 = vld [vmem:[#allocation2 + $0xf0] sm:$0xff]
          %v681 = vld [vmem:[#allocation2 + $0xf8] sm:$0xff]
          %v682 = vld [vmem:[%s2] sm:$0x1]
          %v684 = vperm.slane %v682, 0
          %v686 = vadd.f32 %v650, %v684
          %v687 = vadd.f32 %v651, %v684
          %v688 = vadd.f32 %v652, %v684
          %v689 = vadd.f32 %v653, %v684
          %v690 = vadd.f32 %v654, %v684
          %v691 = vadd.f32 %v655, %v684
          %v692 = vadd.f32 %v656, %v684
          %v693 = vadd.f32 %v657, %v684
          %v694 = vadd.f32 %v658, %v684
          %v695 = vadd.f32 %v659, %v684
          %v696 = vadd.f32 %v660, %v684
          %v697 = vadd.f32 %v661, %v684
          %v698 = vadd.f32 %v662, %v684
          %v699 = vadd.f32 %v663, %v684
          %v700 = vadd.f32 %v664, %v684
          %v701 = vadd.f32 %v665, %v684
          %v702 = vadd.f32 %v666, %v684
          %v703 = vadd.f32 %v667, %v684
          %v704 = vadd.f32 %v668, %v684
          %v705 = vadd.f32 %v669, %v684
          %v706 = vadd.f32 %v670, %v684
          %v707 = vadd.f32 %v671, %v684
          %v708 = vadd.f32 %v672, %v684
          %v709 = vadd.f32 %v673, %v684
          %v710 = vadd.f32 %v674, %v684
          %v711 = vadd.f32 %v675, %v684
          %v712 = vadd.f32 %v676, %v684
          %v713 = vadd.f32 %v677, %v684
          %v714 = vadd.f32 %v678, %v684
          %v715 = vadd.f32 %v679, %v684
          %v716 = vadd.f32 %v680, %v684
          %v717 = vadd.f32 %v681, %v684
          %v718 = vpack.c.bf16 %v686, %v686
          %v719 = vpack.c.bf16 %v687, %v687
          %v720 = vpack.c.bf16 %v688, %v688
          %v721 = vpack.c.bf16 %v689, %v689
          %v722 = vpack.c.bf16 %v690, %v690
          %v723 = vpack.c.bf16 %v691, %v691
          %v724 = vpack.c.bf16 %v692, %v692
          %v725 = vpack.c.bf16 %v693, %v693
          %v726 = vpack.c.bf16 %v694, %v694
          %v727 = vpack.c.bf16 %v695, %v695
          %v728 = vpack.c.bf16 %v696, %v696
          %v729 = vpack.c.bf16 %v697, %v697
          %v730 = vpack.c.bf16 %v698, %v698
          %v731 = vpack.c.bf16 %v699, %v699
          %v732 = vpack.c.bf16 %v700, %v700
          %v733 = vpack.c.bf16 %v701, %v701
          %v734 = vpack.c.bf16 %v702, %v702
          %v735 = vpack.c.bf16 %v703, %v703
          %v736 = vpack.c.bf16 %v704, %v704
          %v737 = vpack.c.bf16 %v705, %v705
          %v738 = vpack.c.bf16 %v706, %v706
          %v739 = vpack.c.bf16 %v707, %v707
          %v740 = vpack.c.bf16 %v708, %v708
          %v741 = vpack.c.bf16 %v709, %v709
          %v742 = vpack.c.bf16 %v710, %v710
          %v743 = vpack.c.bf16 %v711, %v711
          %v744 = vpack.c.bf16 %v712, %v712
          %v745 = vpack.c.bf16 %v713, %v713
          %v746 = vpack.c.bf16 %v714, %v714
          %v747 = vpack.c.bf16 %v715, %v715
          %v748 = vpack.c.bf16 %v716, %v716
          %v749 = vpack.c.bf16 %v717, %v717
          %750 = vst [vmem:[%s230] sm:$0xf] %v718
          %751 = vst [vmem:[%s230 + $0x4] sm:$0xf] %v719
          %752 = vst [vmem:[%s230 + $0x8] sm:$0xf] %v720
          %753 = vst [vmem:[%s230 + $0xc] sm:$0xf] %v721
          %754 = vst [vmem:[%s230 + $0x10] sm:$0xf] %v722
          %755 = vst [vmem:[%s230 + $0x14] sm:$0xf] %v723
          %756 = vst [vmem:[%s230 + $0x18] sm:$0xf] %v724
          %757 = vst [vmem:[%s230 + $0x1c] sm:$0xf] %v725
          %758 = vst [vmem:[%s230 + $0x20] sm:$0xf] %v726
          %759 = vst [vmem:[%s230 + $0x24] sm:$0xf] %v727
          %760 = vst [vmem:[%s230 + $0x28] sm:$0xf] %v728
          %761 = vst [vmem:[%s230 + $0x2c] sm:$0xf] %v729
          %762 = vst [vmem:[%s230 + $0x30] sm:$0xf] %v730
          %763 = vst [vmem:[%s230 + $0x34] sm:$0xf] %v731
          %764 = vst [vmem:[%s230 + $0x38] sm:$0xf] %v732
          %765 = vst [vmem:[%s230 + $0x3c] sm:$0xf] %v733
          %766 = vst [vmem:[%s230 + $0x40] sm:$0xf] %v734
          %767 = vst [vmem:[%s230 + $0x44] sm:$0xf] %v735
          %768 = vst [vmem:[%s230 + $0x48] sm:$0xf] %v736
          %769 = vst [vmem:[%s230 + $0x4c] sm:$0xf] %v737
          %770 = vst [vmem:[%s230 + $0x50] sm:$0xf] %v738
          %771 = vst [vmem:[%s230 + $0x54] sm:$0xf] %v739
          %772 = vst [vmem:[%s230 + $0x58] sm:$0xf] %v740
          %773 = vst [vmem:[%s230 + $0x5c] sm:$0xf] %v741
          %774 = vst [vmem:[%s230 + $0x60] sm:$0xf] %v742
          %775 = vst [vmem:[%s230 + $0x64] sm:$0xf] %v743
          %776 = vst [vmem:[%s230 + $0x68] sm:$0xf] %v744
          %777 = vst [vmem:[%s230 + $0x6c] sm:$0xf] %v745
          %778 = vst [vmem:[%s230 + $0x70] sm:$0xf] %v746
          %779 = vst [vmem:[%s230 + $0x74] sm:$0xf] %v747
          %780 = vst [vmem:[%s230 + $0x78] sm:$0xf] %v748
          %781 = vst [vmem:[%s230 + $0x7c] sm:$0xf] %v749
        $region48: #{tpu_custom_call.1} parent=31 // pred_fallthru
          _
        %s782 = sand.u32 %s116, 1
        %s783 = scalar_lea.sflag [#allocation5], %s782
        %s784 = sand.u32 %s116, 1
        %s785 = smul.addr %s784, 128
        %s786 = scalar_lea.vmem [#allocation8], %s785
        // Predicated region
        $region49: #{tpu_custom_call.1} parent=31 // pred_check
          %p787 = pneg %p126
        $region50: #{tpu_custom_call.1} parent=31 // pred_check_branch
          %789 = sbr.rel (%p787) target = $region52
        $region51: #{tpu_custom_call.1} parent=31 // pred_region
          %s790 = smul.u32 32, %s25
          %792 = vsyncadd %s783, 0
          %s793 = smul.addr %s790, 4
          %s794 = scalar_lea.hbm %s3, %s793
          %s795 = sshll.u32 %s786, 4
          %s796 = int_to_ptr.vmem [resolvable:$true] %s795
          %s797 = sshll.u32 %s794, 4
          %s798 = int_to_ptr.hbm [resolvable:$true] %s797
          %803 = dma.vmem_to_hbm [thread:$0]  %s796, 2048, %s798, %s783, 64, 64, 4
        $region52: #{tpu_custom_call.1} parent=31 // pred_fallthru
          _
      $region32: #{tpu_custom_call.1} parent=5 // pred_fallthru
        _
      %p804 = scmp.le.s32.totalorder 2, %s16
      // Predicated region
      $region53: #{tpu_custom_call.1} parent=5 // pred_check
        %p805 = pneg %p804
      $region54: #{tpu_custom_call.1} parent=5 // pred_check_branch
        %807 = sbr.rel (%p805) target = $region56
      $region55: #{tpu_custom_call.1} parent=5 // pred_region
        %s808 = ssub.s32 %s16, 2
        // Predicated region
        $region57: #{tpu_custom_call.1} parent=55 // pred_check
          %p809 = pneg %p132
        $region58: #{tpu_custom_call.1} parent=55 // pred_check_branch
          %811 = sbr.rel (%p809) target = $region60
        $region59: #{tpu_custom_call.1} parent=55 // pred_region
          %s812 = sand.u32 %s117, 1
          %s813 = scalar_lea.sflag [#allocation5], %s812
          %s814 = sand.u32 %s117, 1
          %s815 = smul.addr %s814, 128
          %s816 = scalar_lea.vmem [#allocation8], %s815
          %818 = dma.done %s813, 2048
        $region60: #{tpu_custom_call.1} parent=55 // pred_fallthru
          _
      $region56: #{tpu_custom_call.1} parent=5 // pred_fallthru
        _
    $region6: #{tpu_custom_call.1} parent=1 // loop_footer
      %s20 = sadd.s32 1, %s16
    $region7: #{tpu_custom_call.1} parent=1 // loop_footer_branch
      %15 = sbr.rel target = $region3
    $region8: #{tpu_custom_call.1} parent=1 // loop_exit
      _
    %819 = vsyncpa [#allocation4], 1
    %s820 = scalar_lea.sflag [#allocation4], 1
    %821 = vsyncpa %s820, 1
    %822 = vsyncpa [#allocation7], 1
    %823 = vsyncpa [#allocation5], 1
    %s824 = scalar_lea.sflag [#allocation5], 1
    %825 = vsyncpa %s824, 1

</llo_original>
